<compile_context>
chip_gen: v6e
topology: v6e:2x2x1
jax: 0.10.0
libtpu: 0.0.40
codegen_flags: <defaults>
</compile_context>

<pallas_src>
import functools

import jax
import jax.numpy as jnp
from jax.experimental import pallas as pl
from jax.experimental.pallas import tpu as pltpu

_LANES = 128
_PAD_LOGIT = -1e9            # softplus(-1e9) == 0 and never picked -> padded pixels add 0
_MAX_BLOCK_BYTES = 4 * 1024 * 1024


def _multi_loss_kernel(x_ref, t_ref, o_ref, *, num_rows, rows_per_tile, mask_rows):
    # x_ref: (1, C, TR, 128)  logits (input dtype)
    # t_ref: (1, TR, 128)     int32 class indices (-1 in padded pixels)
    # o_ref: (1, 1, 1, 128)   per-(batch, hw-tile) partial sums (f32)
    c = x_ref.shape[1]
    t = t_ref[0]                                   # (TR, 128) int32
    acc = jnp.zeros(t.shape, jnp.float32)

    # Static per-channel loop (C is small & known): bounds live intermediates to a
    # single (TR, 128) slab and avoids the (C, TR, 128) iota / one-hot temporaries.
    for ch in range(c):
        xc = x_ref[0, ch].astype(jnp.float32)      # (TR, 128)
        softplus = jnp.maximum(xc, 0.0) + jnp.log1p(jnp.exp(-jnp.abs(xc)))
        acc = acc + softplus - jnp.where(t == ch, xc, 0.0)

    if mask_rows:
        # Last HW tile may extend past the (rows, 128) view; zero the out-of-range
        # rows (their loaded contents are unspecified, possibly NaN/Inf).
        row = jax.lax.broadcasted_iota(jnp.int32, acc.shape, 0)
        valid = pl.program_id(1) * rows_per_tile + row < num_rows
        acc = jnp.where(valid, acc, 0.0)

    # One cheap sublane reduce per tile; the cross-lane reduce of the tiny
    # (N, n_tiles, 1, 128) partials happens in the wrapper.
    o_ref[...] = jnp.sum(acc, axis=0, keepdims=True)[None, None]


def multi_loss(input_d: jax.Array, target_d: jax.Array, *, tile_rows=None) -> jax.Array:
    """input_d: (N, C, H, W) float logits; target_d: (N, H, W) integer class indices."""
    n, c, h, w = input_d.shape
    hw = h * w

    x = input_d.reshape(n, c, hw)                  # free (contiguous) reshape, dtype kept
    t = target_d.reshape(n, hw).astype(jnp.int32)

    if hw % _LANES != 0:
        # TODO(synk): this fallback still materializes a padded HBM copy; a fully
        # copy-free path for HW % 128 != 0 would need a flat-layout kernel (8x sublane
        # waste on the VPU) or manual DMA reassembly, so the aligned case is kept fast
        # and the unaligned case pads only to the next multiple of 128.
        pad = _LANES - hw % _LANES
        x = jnp.pad(x, ((0, 0), (0, 0), (0, pad)), constant_values=_PAD_LOGIT)
        t = jnp.pad(t, ((0, 0), (0, pad)), constant_values=-1)
    hw_p = x.shape[-1]
    rows = hw_p // _LANES

    itemsize = jnp.dtype(x.dtype).itemsize
    max_tr = max(8, (_MAX_BLOCK_BYTES // (c * _LANES * itemsize)) // 8 * 8)
    if tile_rows is None:
        # If everything fits in one block, use the exact row count (full-dim block is
        # always tiling-legal); otherwise the largest multiple-of-8 row tile under the cap.
        tr = rows if rows <= max_tr else max_tr
    else:
        tr = tile_rows
        assert tr == rows or (tr % 8 == 0 and tr <= rows), "tile_rows must be a multiple of 8"
    num_tiles = (rows + tr - 1) // tr
    mask_rows = (rows % tr) != 0

    x4 = x.reshape(n, c, rows, _LANES)             # free reshapes -> (8,128)-legal blocks
    t3 = t.reshape(n, rows, _LANES)

    kernel = functools.partial(
        _multi_loss_kernel, num_rows=rows, rows_per_tile=tr, mask_rows=mask_rows)

    cost = pl.CostEstimate(
        flops=10 * n * c * hw,
        transcendentals=2 * n * c * hw,
        bytes_accessed=(x4.size * itemsize + t3.size * 4 + n * num_tiles * _LANES * 4),
    )

    partials = pl.pallas_call(
        kernel,
        out_shape=jax.ShapeDtypeStruct((n, num_tiles, 1, _LANES), jnp.float32),
        grid=(n, num_tiles),
        in_specs=[
            pl.BlockSpec((1, c, tr, _LANES), lambda i, j: (i, 0, j, 0)),
            pl.BlockSpec((1, tr, _LANES), lambda i, j: (i, j, 0)),
        ],
        out_specs=pl.BlockSpec((1, 1, 1, _LANES), lambda i, j: (i, j, 0, 0)),
        compiler_params=pltpu.CompilerParams(
            dimension_semantics=("parallel", "parallel"),
            vmem_limit_bytes=32 * 1024 * 1024,
        ),
        cost_estimate=cost,
    )(x4, t3)

    # Final tiny reduction of the per-tile (1,128) partials to the scalar loss.
    return jnp.sum(partials)


def _reference(input_d, target_d):
    # Pure-JAX mirror of the PyTorch forward.
    p = jax.nn.sigmoid(input_d.astype(jnp.float32))
    c = input_d.shape[1]
    target_v = jax.nn.one_hot(target_d, c, axis=1, dtype=jnp.float32)
    loss = -(target_v * jnp.log(p + 1e-9) + (1.0 - target_v) * jnp.log(1.0 - p + 1e-9))
    return loss.sum()


if __name__ == "__main__":
    key = jax.random.PRNGKey(0)
    k1, k2, k3, k4 = jax.random.split(key, 4)

    # Test 1: module's nominal shapes; HW % 128 == 0 -> no pad, single tile per batch.
    N, C, H, W = 2, 4, 16, 16
    input_d = jax.random.normal(k1, (N, C, H, W), dtype=jnp.float32)
    target_d = jax.random.randint(k2, (N, H, W), 0, C, dtype=jnp.int32)
    result = multi_loss(input_d, target_d)
    jax.block_until_ready(result)
    ref = _reference(input_d, target_d)
    assert jnp.allclose(result, ref, rtol=1e-4, atol=1e-2), (result, ref)

    # Test 2: HW % 128 != 0 (pad fallback), single full-dim tile (rows not multiple of 8).
    N2, C2, H2, W2 = 2, 3, 50, 50
    x2 = jax.random.normal(k3, (N2, C2, H2, W2), dtype=jnp.float32)
    t2 = jax.random.randint(k4, (N2, H2, W2), 0, C2, dtype=jnp.int32)
    r2 = multi_loss(x2, t2)
    jax.block_until_ready(r2)
    ref2 = _reference(x2, t2)
    assert jnp.allclose(r2, ref2, rtol=1e-4, atol=1e-2), (r2, ref2)

    # Test 3: same data, forced small row tile -> multi-tile grid + ragged-row masking.
    r3 = multi_loss(x2, t2, tile_rows=8)
    jax.block_until_ready(r3)
    assert jnp.allclose(r3, ref2, rtol=1e-4, atol=1e-2), (r3, ref2)

    print("KERNEL_OK")
</pallas_src>

<mosaic_0001>
module attributes {stable_mosaic.version = 11 : i64} {
  func.func @_multi_loss_kernel(%arg0: i32, %arg1: i32, %arg2: memref<1x4x2x128xf32, #tpu.memory_space<vmem>>, %arg3: memref<1x2x128xi32, #tpu.memory_space<vmem>>, %arg4: memref<1x1x1x128xf32, #tpu.memory_space<vmem>>) attributes {dimension_semantics = [#tpu.dimension_semantics<parallel>, #tpu.dimension_semantics<parallel>], iteration_bounds = array<i64: 2, 1>, scalar_prefetch = 0 : i64, scratch_operands = 0 : i64, tpu.core_type = #tpu.core_type<tc>, window_params = [{transform_indices = @transform_0, window_bounds = array<i64: 1, 4, 2, 128>}, {transform_indices = @transform_1, window_bounds = array<i64: 1, 2, 128>}, {transform_indices = @transform_2, window_bounds = array<i64: 1, 1, 1, 128>}]} {
    %c0 = arith.constant 0 : index
    %c0_0 = arith.constant 0 : index
    %c0_1 = arith.constant 0 : index
    %0 = vector.load %arg3[%c0, %c0_0, %c0_1] : memref<1x2x128xi32, #tpu.memory_space<vmem>>, vector<1x2x128xi32>
    %1 = vector.shape_cast %0 : vector<1x2x128xi32> to vector<2x128xi32>
    %cst = arith.constant 0.000000e+00 : f32
    %2 = vector.broadcast %cst : f32 to vector<2x128xf32>
    %c0_2 = arith.constant 0 : index
    %c0_3 = arith.constant 0 : index
    %c0_4 = arith.constant 0 : index
    %c0_5 = arith.constant 0 : index
    %3 = vector.load %arg2[%c0_2, %c0_3, %c0_4, %c0_5] : memref<1x4x2x128xf32, #tpu.memory_space<vmem>>, vector<1x1x2x128xf32>
    %4 = vector.shape_cast %3 : vector<1x1x2x128xf32> to vector<2x128xf32>
    %cst_6 = arith.constant 0.000000e+00 : f32
    %5 = vector.broadcast %cst_6 : f32 to vector<2x128xf32>
    %6 = arith.maximumf %4, %5 : vector<2x128xf32>
    %7 = math.absf %4 : vector<2x128xf32>
    %cst_7 = arith.constant 0.000000e+00 : f32
    %8 = vector.broadcast %cst_7 : f32 to vector<2x128xf32>
    %9 = arith.subf %8, %7 : vector<2x128xf32>
    %10 = math.exp %9 : vector<2x128xf32>
    %11 = math.log1p %10 : vector<2x128xf32>
    %12 = arith.addf %6, %11 : vector<2x128xf32>
    %13 = arith.addf %2, %12 : vector<2x128xf32>
    %c0_i32 = arith.constant 0 : i32
    %14 = vector.broadcast %c0_i32 : i32 to vector<2x128xi32>
    %15 = arith.cmpi eq, %1, %14 : vector<2x128xi32>
    %cst_8 = arith.constant 0.000000e+00 : f32
    %16 = vector.broadcast %cst_8 : f32 to vector<2x128xf32>
    %17 = arith.select %15, %4, %16 : vector<2x128xi1>, vector<2x128xf32>
    %18 = arith.subf %13, %17 : vector<2x128xf32>
    %c0_9 = arith.constant 0 : index
    %c1 = arith.constant 1 : index
    %c0_10 = arith.constant 0 : index
    %c0_11 = arith.constant 0 : index
    %19 = vector.load %arg2[%c0_9, %c1, %c0_10, %c0_11] : memref<1x4x2x128xf32, #tpu.memory_space<vmem>>, vector<1x1x2x128xf32>
    %20 = vector.shape_cast %19 : vector<1x1x2x128xf32> to vector<2x128xf32>
    %cst_12 = arith.constant 0.000000e+00 : f32
    %21 = vector.broadcast %cst_12 : f32 to vector<2x128xf32>
    %22 = arith.maximumf %20, %21 : vector<2x128xf32>
    %23 = math.absf %20 : vector<2x128xf32>
    %cst_13 = arith.constant 0.000000e+00 : f32
    %24 = vector.broadcast %cst_13 : f32 to vector<2x128xf32>
    %25 = arith.subf %24, %23 : vector<2x128xf32>
    %26 = math.exp %25 : vector<2x128xf32>
    %27 = math.log1p %26 : vector<2x128xf32>
    %28 = arith.addf %22, %27 : vector<2x128xf32>
    %29 = arith.addf %18, %28 : vector<2x128xf32>
    %c1_i32 = arith.constant 1 : i32
    %30 = vector.broadcast %c1_i32 : i32 to vector<2x128xi32>
    %31 = arith.cmpi eq, %1, %30 : vector<2x128xi32>
    %cst_14 = arith.constant 0.000000e+00 : f32
    %32 = vector.broadcast %cst_14 : f32 to vector<2x128xf32>
    %33 = arith.select %31, %20, %32 : vector<2x128xi1>, vector<2x128xf32>
    %34 = arith.subf %29, %33 : vector<2x128xf32>
    %c0_15 = arith.constant 0 : index
    %c2 = arith.constant 2 : index
    %c0_16 = arith.constant 0 : index
    %c0_17 = arith.constant 0 : index
    %35 = vector.load %arg2[%c0_15, %c2, %c0_16, %c0_17] : memref<1x4x2x128xf32, #tpu.memory_space<vmem>>, vector<1x1x2x128xf32>
    %36 = vector.shape_cast %35 : vector<1x1x2x128xf32> to vector<2x128xf32>
    %cst_18 = arith.constant 0.000000e+00 : f32
    %37 = vector.broadcast %cst_18 : f32 to vector<2x128xf32>
    %38 = arith.maximumf %36, %37 : vector<2x128xf32>
    %39 = math.absf %36 : vector<2x128xf32>
    %cst_19 = arith.constant 0.000000e+00 : f32
    %40 = vector.broadcast %cst_19 : f32 to vector<2x128xf32>
    %41 = arith.subf %40, %39 : vector<2x128xf32>
    %42 = math.exp %41 : vector<2x128xf32>
    %43 = math.log1p %42 : vector<2x128xf32>
    %44 = arith.addf %38, %43 : vector<2x128xf32>
    %45 = arith.addf %34, %44 : vector<2x128xf32>
    %c2_i32 = arith.constant 2 : i32
    %46 = vector.broadcast %c2_i32 : i32 to vector<2x128xi32>
    %47 = arith.cmpi eq, %1, %46 : vector<2x128xi32>
    %cst_20 = arith.constant 0.000000e+00 : f32
    %48 = vector.broadcast %cst_20 : f32 to vector<2x128xf32>
    %49 = arith.select %47, %36, %48 : vector<2x128xi1>, vector<2x128xf32>
    %50 = arith.subf %45, %49 : vector<2x128xf32>
    %c0_21 = arith.constant 0 : index
    %c3 = arith.constant 3 : index
    %c0_22 = arith.constant 0 : index
    %c0_23 = arith.constant 0 : index
    %51 = vector.load %arg2[%c0_21, %c3, %c0_22, %c0_23] : memref<1x4x2x128xf32, #tpu.memory_space<vmem>>, vector<1x1x2x128xf32>
    %52 = vector.shape_cast %51 : vector<1x1x2x128xf32> to vector<2x128xf32>
    %cst_24 = arith.constant 0.000000e+00 : f32
    %53 = vector.broadcast %cst_24 : f32 to vector<2x128xf32>
    %54 = arith.maximumf %52, %53 : vector<2x128xf32>
    %55 = math.absf %52 : vector<2x128xf32>
    %cst_25 = arith.constant 0.000000e+00 : f32
    %56 = vector.broadcast %cst_25 : f32 to vector<2x128xf32>
    %57 = arith.subf %56, %55 : vector<2x128xf32>
    %58 = math.exp %57 : vector<2x128xf32>
    %59 = math.log1p %58 : vector<2x128xf32>
    %60 = arith.addf %54, %59 : vector<2x128xf32>
    %61 = arith.addf %50, %60 : vector<2x128xf32>
    %c3_i32 = arith.constant 3 : i32
    %62 = vector.broadcast %c3_i32 : i32 to vector<2x128xi32>
    %63 = arith.cmpi eq, %1, %62 : vector<2x128xi32>
    %cst_26 = arith.constant 0.000000e+00 : f32
    %64 = vector.broadcast %cst_26 : f32 to vector<2x128xf32>
    %65 = arith.select %63, %52, %64 : vector<2x128xi1>, vector<2x128xf32>
    %66 = arith.subf %61, %65 : vector<2x128xf32>
    %cst_27 = arith.constant dense<0.000000e+00> : vector<128xf32>
    %67 = vector.multi_reduction <add>, %66, %cst_27 [0] : vector<2x128xf32> to vector<128xf32>
    %68 = vector.shape_cast %67 : vector<128xf32> to vector<1x128xf32>
    %69 = vector.shape_cast %68 : vector<1x128xf32> to vector<1x1x1x128xf32>
    %c0_28 = arith.constant 0 : index
    %c0_29 = arith.constant 0 : index
    %c0_30 = arith.constant 0 : index
    %c0_31 = arith.constant 0 : index
    %70 = vector.load %arg4[%c0_28, %c0_29, %c0_30, %c0_31] : memref<1x1x1x128xf32, #tpu.memory_space<vmem>>, vector<1x1x1x128xf32>
    tpu.vector_store %arg4[%c0_28, %c0_29, %c0_30, %c0_31], %69 {strides = array<i32>} : memref<1x1x1x128xf32, #tpu.memory_space<vmem>>, vector<1x1x1x128xf32>,
    return
  }
  func.func @transform_0(%arg0: i32, %arg1: i32) -> (i32, i32, i32, i32) {
    %c0_i32 = arith.constant 0 : i32
    %c0_i32_0 = arith.constant 0 : i32
    %c0_i32_1 = arith.constant 0 : i32
    return %arg0, %c0_i32, %arg1, %c0_i32_0 : i32, i32, i32, i32
  }
  func.func @transform_1(%arg0: i32, %arg1: i32) -> (i32, i32, i32) {
    %c0_i32 = arith.constant 0 : i32
    %c0_i32_0 = arith.constant 0 : i32
    return %arg0, %arg1, %c0_i32 : i32, i32, i32
  }
  func.func @transform_2(%arg0: i32, %arg1: i32) -> (i32, i32, i32, i32) {
    %c0_i32 = arith.constant 0 : i32
    %c0_i32_0 = arith.constant 0 : i32
    %c0_i32_1 = arith.constant 0 : i32
    return %arg0, %arg1, %c0_i32, %c0_i32_0 : i32, i32, i32, i32
  }
}

</mosaic_0001>

<llo_original>
// kernel: tpu_custom_call.1
$region0: #{tpu_custom_call.1}
  #allocation0 [shape = 'u32[]', space=smem, size = 0x4, offset = 0x4, fixed_abs, tag = 'smem constant byte address 0x4 - core index']
  #allocation1 [shape = 'u32[144,128]{1,0:T(1,128)}', space=vmem, size = 0x12000, scoped, tag = 'internal scratch']
  %s0 = inlined_call_operand.hbm [shape: f32[2,4,2,128], index: 0, kind: input, shape index: {}]
  %s1 = inlined_call_operand.hbm [shape: s32[2,2,128], index: 1, kind: input, shape index: {}]
  %s2 = inlined_call_operand.hbm [shape: f32[2,1,1,128], index: 2, kind: output, shape index: {}]
  %s3 = sld [smem:[#allocation0]]
  $region49: #{tpu_custom_call.1} parent=0
    _
  %s5 = ssub.s32 1, %s3
  %s6 = scalar_select 0, %s5, %s3
  $region1: #{tpu_custom_call.1} parent=0
    #allocation2 [shape = 'u8[8192]{0}', space=vmem, size = 0x2000, scoped, tag = 'input window, operand 0']
    #allocation3 [shape = 's32[2]{0}', space=sflag, size = 0x8, scoped, tag = 'scoped memory for tpu_custom_call.1']
    #allocation4 [shape = 's32[2]{0}', space=sflag, size = 0x8, scoped, tag = 'scoped memory for tpu_custom_call.1']
    #allocation5 [shape = 'u8[2048]{0}', space=vmem, size = 0x800, scoped, tag = 'input window, operand 1']
    #allocation6 [shape = 's32[2]{0}', space=sflag, size = 0x8, scoped, tag = 'scoped memory for tpu_custom_call.1']
    #allocation7 [shape = 'u8[1024]{0}', space=vmem, size = 0x400, scoped, tag = 'output window, operand 0']
    %7 = vsyncpa [#allocation3], 0
    %s8 = scalar_lea.sflag [#allocation3], 1
    %9 = vsyncpa %s8, 0
    %10 = vsyncpa [#allocation6], 0
    %s11 = scalar_lea.sflag [#allocation6], 1
    %12 = vsyncpa %s11, 0
    %13 = vsyncpa [#allocation4], 0
    %s14 = scalar_lea.sflag [#allocation4], 1
    %15 = vsyncpa %s14, 0
    loop: start=0, step=1, limit=4
    $region2: #{tpu_custom_call.1} parent=1 // loop_pre_header
      _
    $region3: #{tpu_custom_call.1} parent=1 // loop_header
      %s17 = sphi 0, %s21
      %p18 = scmp.ge.s32.totalorder %s17, 4
      %s24 = sphi 0, %s36
      %s25 = sphi 0, %s32
      %s26 = sphi 0, %s24
      %s27 = sphi 0, %s25
      %s28 = sphi 0, %s26
      %s29 = sphi 0, %s27
      %s41 = sphi 0, %s43
      %s44 = sphi 0, %s41
      %s45 = sphi 0, %s44
      %s61 = sphi 0, %s45
      %s69 = sphi 0, %s71
      %s72 = sphi 0, %s69
      %s73 = sphi 0, %s72
      %s89 = sphi 0, %s73
      %s97 = sphi 0, %s99
      %s100 = sphi 0, %s97
      %s101 = sphi 0, %s100
      %s117 = sphi 0, %s101
    $region4: #{tpu_custom_call.1} parent=1 // loop_header_branch
      %20 = sbr.rel (%p18) target = $region8
    $region5: #{tpu_custom_call.1} parent=1 // loop_body
      %s22 = ssub.s32 %s17, 1
      %s23 = ssub.s32 %s17, 2
      %s30 = sadd.s32 1, %s25
      %p31 = scmp.ge.s32.totalorder %s30, 1
      %s32 = scalar_select %p31, 0, %s30
      %s33 = sadd.s32 1, %s24
      %s34 = scalar_select %p31, %s33, %s24
      %p35 = scmp.ge.s32.totalorder %s34, 2
      %s36 = scalar_select %p35, 0, %s34
      %s37 = ssub.s32 %s24, %s36
      %s38 = ssub.s32 %s25, %s32
      %s39 = sor.u32 %s37, %s38
      %p40 = scmp.eq.s32.totalorder %s39, 0
      %s42 = sadd.s32 %s41, 1
      %s43 = scalar_select %p40, %s41, %s42
      %p46 = pneg %p40
      %p47 = scmp.eq.s32.totalorder %s17, 1
      %p48 = por %p46, %p47
      %p49 = scmp.ne.s32.totalorder %s41, %s44
      %p50 = scmp.eq.s32.totalorder %s17, 0
      %p51 = por %p49, %p50
      %p52 = scmp.ne.s32.totalorder %s41, %s44
      %p53 = scmp.eq.s32.totalorder %s22, 1
      %p54 = por %p52, %p53
      %p55 = scmp.ne.s32.totalorder %s44, %s45
      %p56 = scmp.eq.s32.totalorder %s22, 0
      %p57 = por %p55, %p56
      %p58 = scmp.ne.s32.totalorder %s44, %s45
      %p59 = scmp.eq.s32.totalorder %s23, 1
      %p60 = por %p58, %p59
      %p62 = scmp.ne.s32.totalorder %s45, %s61
      %p63 = scmp.eq.s32.totalorder %s23, 0
      %p64 = por %p62, %p63
      %s65 = ssub.s32 %s24, %s36
      %s66 = ssub.s32 %s25, %s32
      %s67 = sor.u32 %s65, %s66
      %p68 = scmp.eq.s32.totalorder %s67, 0
      %s70 = sadd.s32 %s69, 1
      %s71 = scalar_select %p68, %s69, %s70
      %p74 = pneg %p68
      %p75 = scmp.eq.s32.totalorder %s17, 1
      %p76 = por %p74, %p75
      %p77 = scmp.ne.s32.totalorder %s69, %s72
      %p78 = scmp.eq.s32.totalorder %s17, 0
      %p79 = por %p77, %p78
      %p80 = scmp.ne.s32.totalorder %s69, %s72
      %p81 = scmp.eq.s32.totalorder %s22, 1
      %p82 = por %p80, %p81
      %p83 = scmp.ne.s32.totalorder %s72, %s73
      %p84 = scmp.eq.s32.totalorder %s22, 0
      %p85 = por %p83, %p84
      %p86 = scmp.ne.s32.totalorder %s72, %s73
      %p87 = scmp.eq.s32.totalorder %s23, 1
      %p88 = por %p86, %p87
      %p90 = scmp.ne.s32.totalorder %s73, %s89
      %p91 = scmp.eq.s32.totalorder %s23, 0
      %p92 = por %p90, %p91
      %s93 = ssub.s32 %s24, %s36
      %s94 = ssub.s32 %s25, %s32
      %s95 = sor.u32 %s93, %s94
      %p96 = scmp.eq.s32.totalorder %s95, 0
      %s98 = sadd.s32 %s97, 1
      %s99 = scalar_select %p96, %s97, %s98
      %p102 = pneg %p96
      %p103 = scmp.eq.s32.totalorder %s17, 1
      %p104 = por %p102, %p103
      %p105 = scmp.ne.s32.totalorder %s97, %s100
      %p106 = scmp.eq.s32.totalorder %s17, 0
      %p107 = por %p105, %p106
      %p108 = scmp.ne.s32.totalorder %s97, %s100
      %p109 = scmp.eq.s32.totalorder %s22, 1
      %p110 = por %p108, %p109
      %p111 = scmp.ne.s32.totalorder %s100, %s101
      %p112 = scmp.eq.s32.totalorder %s22, 0
      %p113 = por %p111, %p112
      %p114 = scmp.ne.s32.totalorder %s100, %s101
      %p115 = scmp.eq.s32.totalorder %s23, 1
      %p116 = por %p114, %p115
      %p118 = scmp.ne.s32.totalorder %s101, %s117
      %p119 = scmp.eq.s32.totalorder %s23, 0
      %p120 = por %p118, %p119
      %p121 = scmp.le.s32.totalorder 1, %s17
      %p122 = scmp.lt.s32.totalorder %s17, 3
      %p123 = pnand %p121, %p122
      %p124 = pneg %p123
      // Predicated region
      $region9: #{tpu_custom_call.1} parent=5 // pred_check
        _
      $region10: #{tpu_custom_call.1} parent=5 // pred_check_branch
        %126 = sbr.rel (%p123) target = $region12
      $region11: #{tpu_custom_call.1} parent=5 // pred_region
        %s127 = ssub.s32 %s17, 1
      $region12: #{tpu_custom_call.1} parent=5 // pred_fallthru
        _
      %p128 = scmp.lt.s32.totalorder %s17, 2
      // Predicated region
      $region13: #{tpu_custom_call.1} parent=5 // pred_check
        %p129 = pneg %p128
      $region14: #{tpu_custom_call.1} parent=5 // pred_check_branch
        %131 = sbr.rel (%p129) target = $region16
      $region15: #{tpu_custom_call.1} parent=5 // pred_region
        // Predicated region
        $region17: #{tpu_custom_call.1} parent=15 // pred_check
          %p132 = pneg %p51
        $region18: #{tpu_custom_call.1} parent=15 // pred_check_branch
          %134 = sbr.rel (%p132) target = $region20
        $region19: #{tpu_custom_call.1} parent=15 // pred_region
          %s135 = sand.u32 %s41, 1
          %s136 = scalar_lea.sflag [#allocation3], %s135
          %s137 = sand.u32 %s41, 1
          %s138 = smul.addr %s137, 8
          %s139 = scalar_lea.vmem [#allocation2], %s138
          %s141 = ssub.s32 128, 128
          %142 = vsyncadd %s136, %s141
          %s143 = smul.addr %s24, 4
          %s144 = sadd.s32 %s25, %s143
          %s145 = smul.addr %s144, 32
          %s146 = scalar_lea.hbm %s0, %s145
          %s147 = sshll.u32 %s139, 4
          %s148 = int_to_ptr.vmem [resolvable:$true] %s147
          %153 = dma.hbm_to_vmem [thread:$0]  %s146, 128, %s148, %s136, 32, 32, 2
        $region20: #{tpu_custom_call.1} parent=15 // pred_fallthru
          _
        // Predicated region
        $region21: #{tpu_custom_call.1} parent=15 // pred_check
          %p154 = pneg %p79
        $region22: #{tpu_custom_call.1} parent=15 // pred_check_branch
          %156 = sbr.rel (%p154) target = $region24
        $region23: #{tpu_custom_call.1} parent=15 // pred_region
          %s157 = sand.u32 %s69, 1
          %s158 = scalar_lea.sflag [#allocation6], %s157
          %s159 = sand.u32 %s69, 1
          %s160 = smul.addr %s159, 2
          %s161 = scalar_lea.vmem [#allocation5], %s160
          %s163 = ssub.s32 32, 32
          %164 = vsyncadd %s158, %s163
          %s165 = sadd.s32 %s25, %s24
          %s166 = smul.addr %s165, 32
          %s167 = scalar_lea.hbm %s1, %s166
          %s169 = sshll.u32 %s161, 4
          %s170 = int_to_ptr.vmem [resolvable:$true] %s169
          %172 = dma.hbm_to_vmem [thread:$0]  %s167, 32, %s170, %s158
        $region24: #{tpu_custom_call.1} parent=15 // pred_fallthru
          _
      $region16: #{tpu_custom_call.1} parent=5 // pred_fallthru
        _
      %p173 = scmp.le.s32.totalorder 1, %s17
      %p174 = scmp.lt.s32.totalorder %s17, 3
      %p175 = pnand %p173, %p174
      %p176 = pneg %p175
      // Predicated region
      $region25: #{tpu_custom_call.1} parent=5 // pred_check
        _
      $region26: #{tpu_custom_call.1} parent=5 // pred_check_branch
        %178 = sbr.rel (%p175) target = $region28
      $region27: #{tpu_custom_call.1} parent=5 // pred_region
        %s179 = ssub.s32 %s17, 1
        %s180 = sand.u32 %s44, 1
        %s181 = scalar_lea.sflag [#allocation3], %s180
        %s182 = sand.u32 %s44, 1
        %s183 = smul.addr %s182, 8
        %s184 = scalar_lea.vmem [#allocation2], %s183
        // Predicated region
        $region29: #{tpu_custom_call.1} parent=27 // pred_check
          %p185 = pneg %p57
        $region30: #{tpu_custom_call.1} parent=27 // pred_check_branch
          %187 = sbr.rel (%p185) target = $region32
        $region31: #{tpu_custom_call.1} parent=27 // pred_region
          %188 = dma.done %s181, 128
        $region32: #{tpu_custom_call.1} parent=27 // pred_fallthru
          _
        %s189 = sand.u32 %s72, 1
        %s190 = scalar_lea.sflag [#allocation6], %s189
        %s191 = sand.u32 %s72, 1
        %s192 = smul.addr %s191, 2
        %s193 = scalar_lea.vmem [#allocation5], %s192
        // Predicated region
        $region33: #{tpu_custom_call.1} parent=27 // pred_check
          %p194 = pneg %p85
        $region34: #{tpu_custom_call.1} parent=27 // pred_check_branch
          %196 = sbr.rel (%p194) target = $region36
        $region35: #{tpu_custom_call.1} parent=27 // pred_region
          %197 = dma.done %s190, 32
        $region36: #{tpu_custom_call.1} parent=27 // pred_fallthru
          _
        %s198 = sand.u32 %s44, 1
        %s199 = scalar_lea.sflag [#allocation3], %s198
        %s200 = sand.u32 %s44, 1
        %s201 = smul.addr %s200, 8
        %s202 = scalar_lea.vmem [#allocation2], %s201
        %p203 = pneg %p57
        %p204 = pneg %p54
        %s205 = sand.u32 %s72, 1
        %s206 = scalar_lea.sflag [#allocation6], %s205
        %s207 = sand.u32 %s72, 1
        %s208 = smul.addr %s207, 2
        %s209 = scalar_lea.vmem [#allocation5], %s208
        %p210 = pneg %p85
        %p211 = pneg %p82
        %p212 = pneg %p113
        %p213 = pneg %p110
        %s214 = sand.u32 %s100, 1
        %s215 = scalar_lea.sflag [#allocation4], %s214
        %s216 = sand.u32 %s100, 1
        %s217 = scalar_lea.vmem [#allocation7], %s216
        %v218 = vld [vmem:[%s193] sm:$0x3]
        %v219 = vld [vmem:[%s184] sm:$0x3]
        %v220 = vmax.f32 %v219, 0.0
        %v221 = vand.u32 2147483647, %v219
        %v222 = vsub.f32 0.0, %v221
        %v223 = vmul.f32 %v222, 1.442695
        %v224 = vpow.pop %v223
        %v225 = vadd.f32 %v224, 1.0
        %v226 = vlog2.pop %v225
        %v227 = vmul.f32 %v226, 0.6931472
        %v228 = vmul.f32 -0.5, %v224
        %v229 = vadd.f32 %v228, 1.0
        %v230 = vmul.f32 %v229, %v224
        %v231 = vand.u32 2147483647, %v224
        %vm232 = vcmp.lt.f32.partialorder %v231, 0.0004427343
        %v233 = vsel %vm232, %v230, %v227
        %v234 = vadd.f32 %v220, %v233
        %v235 = vadd.f32 %v234, 0.0
        %vm236 = vcmp.eq.s32.totalorder %v218, 0
        %v237 = vsel %vm236, %v219, 0.0
        %v238 = vsub.f32 %v235, %v237
        %s239 = scalar_lea.vmem %s184, 2 [#allocation2]
        %v240 = vld [vmem:[%s239] sm:$0x3]
        %v241 = vmax.f32 %v240, 0.0
        %v242 = vand.u32 2147483647, %v240
        %v243 = vsub.f32 0.0, %v242
        %v244 = vmul.f32 %v243, 1.442695
        %v245 = vpow.pop %v244
        %v246 = vadd.f32 %v245, 1.0
        %v247 = vlog2.pop %v246
        %v248 = vmul.f32 %v247, 0.6931472
        %v249 = vmul.f32 -0.5, %v245
        %v250 = vadd.f32 %v249, 1.0
        %v251 = vmul.f32 %v250, %v245
        %v252 = vand.u32 2147483647, %v245
        %vm253 = vcmp.lt.f32.partialorder %v252, 0.0004427343
        %v254 = vsel %vm253, %v251, %v248
        %v255 = vadd.f32 %v241, %v254
        %v256 = vadd.f32 %v238, %v255
        %vm257 = vcmp.eq.s32.totalorder %v218, 1
        %v258 = vsel %vm257, %v240, 0.0
        %v259 = vsub.f32 %v256, %v258
        %s260 = scalar_lea.vmem %s184, 4 [#allocation2]
        %v261 = vld [vmem:[%s260] sm:$0x3]
        %v262 = vmax.f32 %v261, 0.0
        %v263 = vand.u32 2147483647, %v261
        %v264 = vsub.f32 0.0, %v263
        %v265 = vmul.f32 %v264, 1.442695
        %v266 = vpow.pop %v265
        %v267 = vadd.f32 %v266, 1.0
        %v268 = vlog2.pop %v267
        %v269 = vmul.f32 %v268, 0.6931472
        %v270 = vmul.f32 -0.5, %v266
        %v271 = vadd.f32 %v270, 1.0
        %v272 = vmul.f32 %v271, %v266
        %v273 = vand.u32 2147483647, %v266
        %vm274 = vcmp.lt.f32.partialorder %v273, 0.0004427343
        %v275 = vsel %vm274, %v272, %v269
        %v276 = vadd.f32 %v262, %v275
        %v277 = vadd.f32 %v259, %v276
        %vm278 = vcmp.eq.s32.totalorder %v218, 2
        %v279 = vsel %vm278, %v261, 0.0
        %v280 = vsub.f32 %v277, %v279
        %s281 = scalar_lea.vmem %s184, 6 [#allocation2]
        %v282 = vld [vmem:[%s281] sm:$0x3]
        %v283 = vmax.f32 %v282, 0.0
        %v284 = vand.u32 2147483647, %v282
        %v285 = vsub.f32 0.0, %v284
        %v286 = vmul.f32 %v285, 1.442695
        %v287 = vpow.pop %v286
        %v288 = vadd.f32 %v287, 1.0
        %v289 = vlog2.pop %v288
        %v290 = vmul.f32 %v289, 0.6931472
        %v291 = vmul.f32 -0.5, %v287
        %v292 = vadd.f32 %v291, 1.0
        %v293 = vmul.f32 %v292, %v287
        %v294 = vand.u32 2147483647, %v287
        %vm295 = vcmp.lt.f32.partialorder %v294, 0.0004427343
        %v296 = vsel %vm295, %v293, %v290
        %v297 = vadd.f32 %v283, %v296
        %v298 = vadd.f32 %v280, %v297
        %vm299 = vcmp.eq.s32.totalorder %v218, 3
        %v300 = vsel %vm299, %v282, 0.0
        %v301 = vsub.f32 %v298, %v300
        %vm302 = vcmask 1041408
        %v303 = vsel %vm302, %v301, 0.0
        %v304 = vrot.slane %v303, 4
        %v305 = vadd.f32 %v303, %v304
        %v306 = vrot.slane %v305, 2
        %v307 = vadd.f32 %v305, %v306
        %v308 = vrot.slane %v307, 1
        %v309 = vadd.f32 %v307, %v308
        %310 = vst [vmem:[%s217] sm:$0x1] %v309
        %s311 = sand.u32 %s100, 1
        %s312 = scalar_lea.sflag [#allocation4], %s311
        %s313 = sand.u32 %s100, 1
        %s314 = scalar_lea.vmem [#allocation7], %s313
        // Predicated region
        $region37: #{tpu_custom_call.1} parent=27 // pred_check
          %p315 = pneg %p110
        $region38: #{tpu_custom_call.1} parent=27 // pred_check_branch
          %317 = sbr.rel (%p315) target = $region40
        $region39: #{tpu_custom_call.1} parent=27 // pred_region
          %s319 = ssub.s32 16, 16
          %320 = vsyncadd %s312, %s319
          %s321 = sadd.s32 %s27, %s26
          %s322 = smul.addr %s321, 16
          %s323 = scalar_lea.hbm %s2, %s322
          %s325 = sshll.u32 %s314, 4
          %s326 = int_to_ptr.vmem [resolvable:$true] %s325
          %328 = dma.vmem_to_hbm [thread:$0]  %s326, 16, %s323, %s312
        $region40: #{tpu_custom_call.1} parent=27 // pred_fallthru
          _
      $region28: #{tpu_custom_call.1} parent=5 // pred_fallthru
        _
      %p329 = scmp.le.s32.totalorder 2, %s17
      // Predicated region
      $region41: #{tpu_custom_call.1} parent=5 // pred_check
        %p330 = pneg %p329
      $region42: #{tpu_custom_call.1} parent=5 // pred_check_branch
        %332 = sbr.rel (%p330) target = $region44
      $region43: #{tpu_custom_call.1} parent=5 // pred_region
        %s333 = ssub.s32 %s17, 2
        // Predicated region
        $region45: #{tpu_custom_call.1} parent=43 // pred_check
          %p334 = pneg %p116
        $region46: #{tpu_custom_call.1} parent=43 // pred_check_branch
          %336 = sbr.rel (%p334) target = $region48
        $region47: #{tpu_custom_call.1} parent=43 // pred_region
          %s337 = sand.u32 %s101, 1
          %s338 = scalar_lea.sflag [#allocation4], %s337
          %s339 = sand.u32 %s101, 1
          %s340 = scalar_lea.vmem [#allocation7], %s339
          %341 = dma.done %s338, 16
        $region48: #{tpu_custom_call.1} parent=43 // pred_fallthru
          _
      $region44: #{tpu_custom_call.1} parent=5 // pred_fallthru
        _
    $region6: #{tpu_custom_call.1} parent=1 // loop_footer
      %s21 = sadd.s32 1, %s17
    $region7: #{tpu_custom_call.1} parent=1 // loop_footer_branch
      %16 = sbr.rel target = $region3
    $region8: #{tpu_custom_call.1} parent=1 // loop_exit
      _
    %342 = vsyncpa [#allocation3], 1
    %s343 = scalar_lea.sflag [#allocation3], 1
    %344 = vsyncpa %s343, 1
    %345 = vsyncpa [#allocation6], 1
    %s346 = scalar_lea.sflag [#allocation6], 1
    %347 = vsyncpa %s346, 1
    %348 = vsyncpa [#allocation4], 1
    %s349 = scalar_lea.sflag [#allocation4], 1
    %350 = vsyncpa %s349, 1

</llo_original>
